<compile_context>
chip_gen: v7x
topology: tpu7x:2x2x1
jax: 0.10.0
libtpu: 0.0.40
codegen_flags: <defaults>
</compile_context>

<pallas_src>
import jax
import jax.numpy as jnp
from jax.experimental import pallas as pl
from jax.experimental.pallas import tpu as pltpu

EPS = 1e-5
LANES = 128


def _round_up(x, m):
    return (x + m - 1) // m * m


def _vmem_capacity_bytes():
    try:
        return int(pltpu.get_tpu_info().vmem_capacity_bytes)
    except Exception:
        return 64 * 1024 * 1024  # conservative fallback (v7x per-TC VMEM)


# ---------------- Pass-1 kernels: GEMM (+ optional bf16 writeback) + per-tile stats --------

def _gemm_stats_kernel(x_ref, w_ref, psum_ref, psumsq_ref, acc_ref):
    # grid = (n_m, n_k); x: [bm, tk] bf16, w: [tk, Cp] bf16; partials: [1, 1, Cp] f32.
    k = pl.program_id(1)

    @pl.when(k == 0)
    def _():
        acc_ref[...] = jnp.zeros_like(acc_ref)

    acc_ref[...] += jnp.dot(x_ref[...], w_ref[...], preferred_element_type=jnp.float32)

    @pl.when(k == pl.num_programs(1) - 1)
    def _():
        y = acc_ref[...]
        psum_ref[...] = jnp.sum(y, axis=0, keepdims=True).reshape(psum_ref.shape)
        psumsq_ref[...] = jnp.sum(y * y, axis=0, keepdims=True).reshape(psumsq_ref.shape)


def _gemm_stats_store_kernel(x_ref, w_ref, y_ref, psum_ref, psumsq_ref, acc_ref):
    # Same as above, but also streams the pre-BN activation out in bf16 (halves HBM bytes).
    k = pl.program_id(1)

    @pl.when(k == 0)
    def _():
        acc_ref[...] = jnp.zeros_like(acc_ref)

    acc_ref[...] += jnp.dot(x_ref[...], w_ref[...], preferred_element_type=jnp.float32)

    @pl.when(k == pl.num_programs(1) - 1)
    def _():
        y = acc_ref[...]
        y_ref[...] = y.astype(y_ref.dtype)
        psum_ref[...] = jnp.sum(y, axis=0, keepdims=True).reshape(psum_ref.shape)
        psumsq_ref[...] = jnp.sum(y * y, axis=0, keepdims=True).reshape(psumsq_ref.shape)


# ---------------- Pass-2 kernels: BN apply + ReLU -------------------------------------------

def _gemm_bn_relu_kernel(x_ref, w_ref, scale_ref, shift_ref, o_ref, acc_ref):
    # Fused path: recompute the GEMM (cheap for small K) so y_pre never touches HBM.
    k = pl.program_id(1)

    @pl.when(k == 0)
    def _():
        acc_ref[...] = jnp.zeros_like(acc_ref)

    acc_ref[...] += jnp.dot(x_ref[...], w_ref[...], preferred_element_type=jnp.float32)

    @pl.when(k == pl.num_programs(1) - 1)
    def _():
        o_ref[...] = jnp.maximum(
            acc_ref[...] * scale_ref[...] + shift_ref[...], 0.0).astype(o_ref.dtype)


def _bn_relu_kernel(y_ref, scale_ref, shift_ref, o_ref):
    # Two-pass path: pure FMA + ReLU stream over the bf16 pre-BN activation.
    y = y_ref[...].astype(jnp.float32)
    o_ref[...] = jnp.maximum(y * scale_ref[...] + shift_ref[...], 0.0).astype(o_ref.dtype)


# ---------------- im2col (bf16, single materialization) -------------------------------------

def _im2col(x, kh, kw, stride, pad):
    # x: [N, C, H, W] (already bf16) -> patches [N*Ho*Wo, C*kh*kw], feature order (C, kh, kw).
    # TODO(synk): fuse patch construction into pass 1 (memory_space=pl.ANY + halo'd row
    # tiles) to remove the kh*kw read amplification of the materialized im2col slab.
    x = jnp.pad(x, ((0, 0), (0, 0), (pad, pad), (pad, pad)))
    N, C, H, W = x.shape
    Ho = (H - kh) // stride + 1
    Wo = (W - kw) // stride + 1
    slabs = []
    for i in range(kh):
        for j in range(kw):
            slabs.append(x[:, :, i:i + Ho * stride:stride, j:j + Wo * stride:stride])
    p = jnp.stack(slabs, axis=2)                 # [N, C, kh*kw, Ho, Wo]
    p = p.transpose(0, 3, 4, 1, 2)               # [N, Ho, Wo, C, kh*kw]
    return p.reshape(N * Ho * Wo, C * kh * kw), Ho, Wo


# ---------------- Tiling / VMEM sizing -------------------------------------------------------

def _pass_vmem_bytes(bm, tk, cp, *, store_y, fused):
    # Double-buffered pipeline tiles (x2) + single-buffered fp32 accumulator scratch.
    p1 = 2 * (bm * tk * 2 + tk * cp * 2 + 2 * cp * 4) + bm * cp * 4
    if store_y:
        p1 += 2 * bm * cp * 2
    if fused:
        p2 = 2 * (bm * tk * 2 + tk * cp * 2 + 2 * cp * 4 + bm * cp * 4) + bm * cp * 4
    else:
        p2 = 2 * (bm * cp * 2 + 2 * cp * 4 + bm * cp * 4)
    return max(p1, p2)


def _choose_block_m(M, tk, cp, *, store_y, fused, budget):
    cap = _round_up(max(M, 8), 8)
    for bm in (2048, 1024, 512, 256, 128, 64, 32, 16, 8):
        bm = min(bm, cap)
        if _pass_vmem_bytes(bm, tk, cp, store_y=store_y, fused=fused) <= budget:
            return bm
    return 8


# ---------------- Wrapper --------------------------------------------------------------------

def conv_block(x, weight, bias, gamma, beta, *, stride=1, padding=1,
               block_m=None, block_k=None, fuse=None, out_layout="NCHW"):
    """ConvBlock forward. x: [N,Cin,H,W] f32; weight: [Cout,Cin,kh,kw]; -> [N,Cout,Ho,Wo] f32.

    `bias` is accepted for interface parity but is a mathematical no-op in front of
    train-mode BatchNorm, so it is never sent to the kernels.
    """
    del bias
    N, Cin, H, W = x.shape
    Cout, _, kh, kw = weight.shape

    # im2col directly in bf16 (MXU operand dtype): one fused materialization of the slab.
    patches, Ho, Wo = _im2col(x.astype(jnp.bfloat16), kh, kw, stride, padding)
    M, K = patches.shape

    # Lane mapping for Cout: lane-dense 128-padding only when Cout >= 128; otherwise keep
    # the true Cout (full-dim block, masked stores) to avoid inflating HBM traffic.
    Cout_p = Cout if Cout < LANES else _round_up(Cout, LANES)

    # K tiling only when K is large enough that a full-K tile would squeeze block_m below
    # the ~512 sweet spot; tiled K blocks must be 128-lane multiples.
    if block_k is None:
        block_k = K if K <= 2048 else 512
    if block_k >= K:
        block_k, K_pad = K, K
    else:
        block_k = max(LANES, _round_up(block_k, LANES))
        K_pad = _round_up(K, block_k)
    n_k = K_pad // block_k

    # Fused (recompute) path: skip the y_pre roundtrip when re-reading the patch slab
    # (2*K bytes/row) is cheaper than writing+reading bf16 y_pre (4*Cout_p bytes/row).
    if fuse is None:
        fuse = (K_pad <= 2 * Cout_p) and (K_pad <= 1536)

    vmem_cap = _vmem_capacity_bytes()
    budget = int(vmem_cap * 0.7)        # ~45 MiB on v7x, ~90 MiB on v5e/v6e
    if block_m is None:
        block_m = _choose_block_m(M, block_k, Cout_p, store_y=not fuse, fused=fuse,
                                  budget=budget)
    block_m = max(8, _round_up(min(block_m, _round_up(M, 8)), 8))
    n_m = pl.cdiv(M, block_m)
    M_pad = n_m * block_m

    need = _pass_vmem_bytes(block_m, block_k, Cout_p, store_y=not fuse, fused=fuse)
    vmem_limit = int(min(vmem_cap * 0.9, max(need + (8 << 20), 32 << 20)))

    # Zero padding keeps the stats exact (padded rows/cols contribute 0; divide by true M).
    patches_p = jnp.pad(patches, ((0, M_pad - M), (0, K_pad - K)))
    w_flat = jnp.pad(weight.reshape(Cout, K).T.astype(jnp.bfloat16),
                     ((0, K_pad - K), (0, Cout_p - Cout)))
    g_row = jnp.pad(gamma.astype(jnp.float32).reshape(1, Cout), ((0, 0), (0, Cout_p - Cout)))
    b_row = jnp.pad(beta.astype(jnp.float32).reshape(1, Cout), ((0, 0), (0, Cout_p - Cout)))

    x_spec = pl.BlockSpec((block_m, block_k), lambda i, k: (i, k))
    # TODO(synk): pipeline_mode=pl.Buffered(1) on the weight / broadcast specs would free
    # their second VMEM buffer when their block index never changes.
    w_spec = pl.BlockSpec((block_k, Cout_p), lambda i, k: (k, 0))
    stat_spec = pl.BlockSpec((1, 1, Cout_p), lambda i, k: (i, 0, 0))
    stat_shape = jax.ShapeDtypeStruct((n_m, 1, Cout_p), jnp.float32)
    acc_scratch = pltpu.VMEM((block_m, Cout_p), jnp.float32)
    cparams = pltpu.CompilerParams(
        dimension_semantics=("parallel", "arbitrary"),   # per-tile partials: M splits cores
        vmem_limit_bytes=vmem_limit)

    # ---- Pass 1: GEMM + per-tile partial sum / sum-of-squares --------------------------
    if fuse:
        psum, psumsq = pl.pallas_call(
            _gemm_stats_kernel,
            out_shape=(stat_shape, stat_shape),
            grid_spec=pltpu.PrefetchScalarGridSpec(
                num_scalar_prefetch=0,
                grid=(n_m, n_k),
                in_specs=[x_spec, w_spec],
                out_specs=[stat_spec, stat_spec],
                scratch_shapes=[acc_scratch]),
            compiler_params=cparams,
        )(patches_p, w_flat)
        y_pre = None
    else:
        y_pre, psum, psumsq = pl.pallas_call(
            _gemm_stats_store_kernel,
            out_shape=(jax.ShapeDtypeStruct((M_pad, Cout_p), jnp.bfloat16),
                       stat_shape, stat_shape),
            grid_spec=pltpu.PrefetchScalarGridSpec(
                num_scalar_prefetch=0,
                grid=(n_m, n_k),
                in_specs=[x_spec, w_spec],
                out_specs=[pl.BlockSpec((block_m, Cout_p), lambda i, k: (i, 0)),
                           stat_spec, stat_spec],
                scratch_shapes=[acc_scratch]),
            compiler_params=cparams,
        )(patches_p, w_flat)

    # ---- Tiny XLA glue: reduce partials, precompute scale/shift once -------------------
    inv_m = 1.0 / float(M)
    mean = jnp.sum(psum[:, 0, :], axis=0, keepdims=True) * inv_m           # [1, Cout_p]
    ex2 = jnp.sum(psumsq[:, 0, :], axis=0, keepdims=True) * inv_m
    var = jnp.maximum(ex2 - mean * mean, 0.0)          # guard E[x^2]-E[x]^2 cancellation
    # TODO(synk): for very large M, combine per-tile partials with a Welford/Chan merge to
    # further reduce fp32 cancellation error.
    scale = g_row * jax.lax.rsqrt(var + EPS)           # fold gamma into rsqrt
    shift = b_row - mean * scale

    # ---- Pass 2: BN apply + ReLU (independent M tiles, "parallel") ---------------------
    out_shape = jax.ShapeDtypeStruct((M_pad, Cout_p), jnp.float32)
    if fuse:
        out_flat = pl.pallas_call(
            _gemm_bn_relu_kernel,
            out_shape=out_shape,
            grid_spec=pltpu.PrefetchScalarGridSpec(
                num_scalar_prefetch=0,
                grid=(n_m, n_k),
                in_specs=[x_spec, w_spec,
                          pl.BlockSpec((1, Cout_p), lambda i, k: (0, 0)),
                          pl.BlockSpec((1, Cout_p), lambda i, k: (0, 0))],
                out_specs=pl.BlockSpec((block_m, Cout_p), lambda i, k: (i, 0)),
                scratch_shapes=[acc_scratch]),
            compiler_params=cparams,
        )(patches_p, w_flat, scale, shift)
    else:
        out_flat = pl.pallas_call(
            _bn_relu_kernel,
            out_shape=out_shape,
            grid_spec=pltpu.PrefetchScalarGridSpec(
                num_scalar_prefetch=0,
                grid=(n_m,),
                in_specs=[pl.BlockSpec((block_m, Cout_p), lambda i: (i, 0)),
                          pl.BlockSpec((1, Cout_p), lambda i: (0, 0)),
                          pl.BlockSpec((1, Cout_p), lambda i: (0, 0))],
                out_specs=pl.BlockSpec((block_m, Cout_p), lambda i: (i, 0))),
            compiler_params=pltpu.CompilerParams(
                dimension_semantics=("parallel",),
                vmem_limit_bytes=vmem_limit),
        )(y_pre, scale, shift)

    out = out_flat[:M, :Cout].reshape(N, Ho, Wo, Cout)
    if out_layout == "NHWC":
        return out
    # TODO(synk): keep NHWC end-to-end in a real network to avoid this output-sized
    # transpose roundtrip; NCHW kept here for parity with the PyTorch module.
    return out.transpose(0, 3, 1, 2)


# ---------------- Reference & self-test ------------------------------------------------------

def _reference(x, weight, bias, gamma, beta, stride=1, padding=1):
    y = jax.lax.conv_general_dilated(
        x, weight, window_strides=(stride, stride),
        padding=((padding, padding), (padding, padding)),
        dimension_numbers=("NCHW", "OIHW", "NCHW"))
    y = y + bias[None, :, None, None]
    mean = y.mean(axis=(0, 2, 3), keepdims=True)
    var = ((y - mean) ** 2).mean(axis=(0, 2, 3), keepdims=True)   # biased (train-mode BN)
    y = (y - mean) / jnp.sqrt(var + EPS) * gamma[None, :, None, None] + beta[None, :, None, None]
    return jnp.maximum(y, 0.0)


if __name__ == "__main__":
    def _run_case(key, N, Cin, Hs, Ws, Cout, ksz, **kwargs):
        kx, kw_, kb, kg, kbe = jax.random.split(key, 5)
        x = jax.random.normal(kx, (N, Cin, Hs, Ws), dtype=jnp.float32)
        weight = 0.1 * jax.random.normal(kw_, (Cout, Cin, ksz, ksz), dtype=jnp.float32)
        bias = 0.1 * jax.random.normal(kb, (Cout,), dtype=jnp.float32)
        gamma = 1.0 + 0.1 * jax.random.normal(kg, (Cout,), dtype=jnp.float32)
        beta = 0.1 * jax.random.normal(kbe, (Cout,), dtype=jnp.float32)

        out = conv_block(x, weight, bias, gamma, beta, stride=1, padding=1, **kwargs)
        out = jax.block_until_ready(out)

        ref = _reference(x, weight, bias, gamma, beta, stride=1, padding=1)
        assert out.shape == ref.shape, (out.shape, ref.shape)
        err = float(jnp.max(jnp.abs(out - ref)))
        # Tolerance reflects bf16 MXU operands / bf16 pre-BN activation (fp32 accumulation).
        assert jnp.allclose(out, ref, rtol=2e-2, atol=3e-2), err
        return err

    key = jax.random.PRNGKey(0)
    k1, k2 = jax.random.split(key)

    # ConvBlock(in_channels=4, out_channels=8, kernel_size=3, padding=1), batch=2, 16x16:
    # multi-tile M grid (M=512 -> 4 tiles of 128), two-pass path with bf16 y_pre.
    _run_case(k1, 2, 4, 16, 16, 8, 3, block_m=128)
    # Same config through the fused (GEMM-recompute, no y_pre) path.
    _run_case(k1, 2, 4, 16, 16, 8, 3, block_m=128, fuse=True)
    # Larger K with a tiled K reduction axis (K=288 -> 3 x 128 blocks) and auto block_m.
    _run_case(k2, 1, 32, 8, 8, 16, 3, block_k=128)

    print("KERNEL_OK")
</pallas_src>

<mosaic_0001>
module attributes {stable_mosaic.version = 11 : i64} {
  func.func @_gemm_stats_store_kernel(%arg0: i32, %arg1: i32, %arg2: memref<128x36xbf16, #tpu.memory_space<vmem>>, %arg3: memref<36x8xbf16, #tpu.memory_space<vmem>>, %arg4: memref<128x8xbf16, #tpu.memory_space<vmem>>, %arg5: memref<1x1x8xf32, #tpu.memory_space<vmem>>, %arg6: memref<1x1x8xf32, #tpu.memory_space<vmem>>, %arg7: memref<128x8xf32, #tpu.memory_space<vmem>>) attributes {dimension_semantics = [#tpu.dimension_semantics<parallel>, #tpu.dimension_semantics<arbitrary>], iteration_bounds = array<i64: 4, 1>, scalar_prefetch = 0 : i64, scratch_operands = 1 : i64, tpu.core_type = #tpu.core_type<tc>, window_params = [{transform_indices = @transform_0, window_bounds = array<i64: 128, 36>}, {transform_indices = @transform_1, window_bounds = array<i64: 36, 8>}, {transform_indices = @transform_2, window_bounds = array<i64: 128, 8>}, {transform_indices = @transform_3, window_bounds = array<i64: 1, 1, 8>}, {transform_indices = @transform_4, window_bounds = array<i64: 1, 1, 8>}]} {
    %c0_i32 = arith.constant 0 : i32
    %0 = arith.cmpi eq, %arg1, %c0_i32 : i32
    %1 = arith.extui %0 : i1 to i32
    %c0_i32_0 = arith.constant 0 : i32
    %2 = arith.cmpi ne, %1, %c0_i32_0 : i32
    scf.if %2 {
      %cst_10 = arith.constant 0.000000e+00 : f32
      %12 = vector.broadcast %cst_10 : f32 to vector<128x8xf32>
      %c0_11 = arith.constant 0 : index
      %c0_12 = arith.constant 0 : index
      %13 = vector.load %arg7[%c0_11, %c0_12] : memref<128x8xf32, #tpu.memory_space<vmem>>, vector<128x8xf32>
      tpu.vector_store %arg7[%c0_11, %c0_12], %12 {strides = array<i32>} : memref<128x8xf32, #tpu.memory_space<vmem>>, vector<128x8xf32>,
    } else {
    }
    %c0 = arith.constant 0 : index
    %c0_1 = arith.constant 0 : index
    %3 = vector.load %arg7[%c0, %c0_1] : memref<128x8xf32, #tpu.memory_space<vmem>>, vector<128x8xf32>
    %c0_2 = arith.constant 0 : index
    %c0_3 = arith.constant 0 : index
    %4 = vector.load %arg2[%c0_2, %c0_3] : memref<128x36xbf16, #tpu.memory_space<vmem>>, vector<128x36xbf16>
    %c0_4 = arith.constant 0 : index
    %c0_5 = arith.constant 0 : index
    %5 = vector.load %arg3[%c0_4, %c0_5] : memref<36x8xbf16, #tpu.memory_space<vmem>>, vector<36x8xbf16>
    %cst = arith.constant dense<0.000000e+00> : vector<128x8xf32>
    %6 = tpu.matmul %4, %5, %cst {dimension_numbers = #tpu.dot_dimension_numbers<[1], [0], [0], [1], [0, 0, 1, 1], [], []>} : vector<128x36xbf16>, vector<36x8xbf16>, vector<128x8xf32> -> vector<128x8xf32>
    %7 = arith.addf %3, %6 : vector<128x8xf32>
    %c0_6 = arith.constant 0 : index
    %c0_7 = arith.constant 0 : index
    %8 = vector.load %arg7[%c0_6, %c0_7] : memref<128x8xf32, #tpu.memory_space<vmem>>, vector<128x8xf32>
    tpu.vector_store %arg7[%c0_6, %c0_7], %7 {strides = array<i32>} : memref<128x8xf32, #tpu.memory_space<vmem>>, vector<128x8xf32>,
    %c0_i32_8 = arith.constant 0 : i32
    %9 = arith.cmpi eq, %arg1, %c0_i32_8 : i32
    %10 = arith.extui %9 : i1 to i32
    %c0_i32_9 = arith.constant 0 : i32
    %11 = arith.cmpi ne, %10, %c0_i32_9 : i32
    scf.if %11 {
      %c0_10 = arith.constant 0 : index
      %c0_11 = arith.constant 0 : index
      %12 = vector.load %arg7[%c0_10, %c0_11] : memref<128x8xf32, #tpu.memory_space<vmem>>, vector<128x8xf32>
      %13 = arith.truncf %12 : vector<128x8xf32> to vector<128x8xbf16>
      %c0_12 = arith.constant 0 : index
      %c0_13 = arith.constant 0 : index
      %14 = vector.load %arg4[%c0_12, %c0_13] : memref<128x8xbf16, #tpu.memory_space<vmem>>, vector<128x8xbf16>
      tpu.vector_store %arg4[%c0_12, %c0_13], %13 {strides = array<i32>} : memref<128x8xbf16, #tpu.memory_space<vmem>>, vector<128x8xbf16>,
      %cst_14 = arith.constant dense<0.000000e+00> : vector<8xf32>
      %15 = vector.multi_reduction <add>, %12, %cst_14 [0] : vector<128x8xf32> to vector<8xf32>
      %16 = vector.shape_cast %15 : vector<8xf32> to vector<1x8xf32>
      %17 = vector.shape_cast %16 : vector<1x8xf32> to vector<1x1x8xf32>
      %c0_15 = arith.constant 0 : index
      %c0_16 = arith.constant 0 : index
      %c0_17 = arith.constant 0 : index
      %18 = vector.load %arg5[%c0_15, %c0_16, %c0_17] : memref<1x1x8xf32, #tpu.memory_space<vmem>>, vector<1x1x8xf32>
      tpu.vector_store %arg5[%c0_15, %c0_16, %c0_17], %17 {strides = array<i32>} : memref<1x1x8xf32, #tpu.memory_space<vmem>>, vector<1x1x8xf32>,
      %19 = arith.mulf %12, %12 : vector<128x8xf32>
      %cst_18 = arith.constant dense<0.000000e+00> : vector<8xf32>
      %20 = vector.multi_reduction <add>, %19, %cst_18 [0] : vector<128x8xf32> to vector<8xf32>
      %21 = vector.shape_cast %20 : vector<8xf32> to vector<1x8xf32>
      %22 = vector.shape_cast %21 : vector<1x8xf32> to vector<1x1x8xf32>
      %c0_19 = arith.constant 0 : index
      %c0_20 = arith.constant 0 : index
      %c0_21 = arith.constant 0 : index
      %23 = vector.load %arg6[%c0_19, %c0_20, %c0_21] : memref<1x1x8xf32, #tpu.memory_space<vmem>>, vector<1x1x8xf32>
      tpu.vector_store %arg6[%c0_19, %c0_20, %c0_21], %22 {strides = array<i32>} : memref<1x1x8xf32, #tpu.memory_space<vmem>>, vector<1x1x8xf32>,
    } else {
    }
    return
  }
  func.func @transform_0(%arg0: i32, %arg1: i32) -> (i32, i32) {
    %c0_i32 = arith.constant 0 : i32
    return %arg0, %arg1 : i32, i32
  }
  func.func @transform_1(%arg0: i32, %arg1: i32) -> (i32, i32) {
    %c0_i32 = arith.constant 0 : i32
    %c0_i32_0 = arith.constant 0 : i32
    return %arg1, %c0_i32 : i32, i32
  }
  func.func @transform_2(%arg0: i32, %arg1: i32) -> (i32, i32) {
    %c0_i32 = arith.constant 0 : i32
    %c0_i32_0 = arith.constant 0 : i32
    return %arg0, %c0_i32 : i32, i32
  }
  func.func @transform_3(%arg0: i32, %arg1: i32) -> (i32, i32, i32) {
    %c0_i32 = arith.constant 0 : i32
    %c0_i32_0 = arith.constant 0 : i32
    %c0_i32_1 = arith.constant 0 : i32
    return %arg0, %c0_i32, %c0_i32_0 : i32, i32, i32
  }
  func.func @transform_4(%arg0: i32, %arg1: i32) -> (i32, i32, i32) {
    %c0_i32 = arith.constant 0 : i32
    %c0_i32_0 = arith.constant 0 : i32
    %c0_i32_1 = arith.constant 0 : i32
    return %arg0, %c0_i32, %c0_i32_0 : i32, i32, i32
  }
}

</mosaic_0001>

<llo_original>
// kernel: tpu_custom_call.1
$region0: #{tpu_custom_call.1}
  #allocation0 [shape = 'u32[]', space=smem, size = 0x4, offset = 0x4, fixed_abs, tag = 'smem constant byte address 0x4 - core index']
  #allocation1 [shape = 'u32[144,128]{1,0:T(1,128)}', space=vmem, size = 0x12000, scoped, tag = 'internal scratch']
  #allocation2 [shape = 'f32[128,8]{1,0:T(8,128)}', space=vmem, size = 0x10000, scoped, tag = 'scratch operand']
  %s0 = inlined_call_operand.vmem [shape: bf16[512,36], index: 0, kind: input, shape index: {}]
  %s1 = inlined_call_operand.vmem [shape: bf16[36,8], index: 1, kind: input, shape index: {}]
  %s2 = inlined_call_operand.vmem [shape: bf16[512,8], index: 2, kind: output, shape index: {0}]
  %s3 = inlined_call_operand.hbm [shape: f32[4,1,8], index: 3, kind: output, shape index: {1}]
  %s4 = inlined_call_operand.hbm [shape: f32[4,1,8], index: 4, kind: output, shape index: {2}]
  %5 = xla_tuple %s2, %s3, %s4
  %s6 = sld [smem:[#allocation0]]
  $region65: #{tpu_custom_call.1} parent=0
    _
  %s8 = ssub.s32 1, %s6
  %s9 = scalar_select 0, %s8, %s6
  $region1: #{tpu_custom_call.1} parent=0
    #allocation3 [shape = 'u8[1024]{0}', space=vmem, size = 0x400, scoped, tag = 'output window, operand 1']
    #allocation4 [shape = 's32[2]{0}', space=sflag, size = 0x8, scoped, tag = 'scoped memory for tpu_custom_call.1']
    #allocation5 [shape = 'u8[1024]{0}', space=vmem, size = 0x400, scoped, tag = 'output window, operand 2']
    #allocation6 [shape = 's32[2]{0}', space=sflag, size = 0x8, scoped, tag = 'scoped memory for tpu_custom_call.1']
    %10 = vsyncpa [#allocation4], 0
    %s11 = scalar_lea.sflag [#allocation4], 1
    %12 = vsyncpa %s11, 0
    %13 = vsyncpa [#allocation6], 0
    %s14 = scalar_lea.sflag [#allocation6], 1
    %15 = vsyncpa %s14, 0
    loop: start=0, step=1, limit=6
    $region2: #{tpu_custom_call.1} parent=1 // loop_pre_header
      _
    $region3: #{tpu_custom_call.1} parent=1 // loop_header
      %s17 = sphi 0, %s21
      %p18 = scmp.ge.s32.totalorder %s17, 6
      %s24 = sphi 0, %s36
      %s25 = sphi 0, %s32
      %s26 = sphi 0, %s24
      %s27 = sphi 0, %s25
      %s28 = sphi 0, %s26
      %s29 = sphi 0, %s27
      %s41 = sphi 0, %s43
      %s44 = sphi 0, %s41
      %s45 = sphi 0, %s44
      %s61 = sphi 0, %s45
      %s67 = sphi 0, %s69
      %s70 = sphi 0, %s67
      %s71 = sphi 0, %s70
      %s87 = sphi 0, %s71
      %s93 = sphi 0, %s95
      %s96 = sphi 0, %s93
      %s97 = sphi 0, %s96
      %s113 = sphi 0, %s97
      %s119 = sphi 0, %s121
      %s122 = sphi 0, %s119
      %s123 = sphi 0, %s122
      %s139 = sphi 0, %s123
      %s145 = sphi 0, %s147
      %s148 = sphi 0, %s145
      %s149 = sphi 0, %s148
      %s165 = sphi 0, %s149
    $region4: #{tpu_custom_call.1} parent=1 // loop_header_branch
      %20 = sbr.rel (%p18) target = $region8
    $region5: #{tpu_custom_call.1} parent=1 // loop_body
      %s22 = ssub.s32 %s17, 1
      %s23 = ssub.s32 %s17, 2
      %s30 = sadd.s32 1, %s25
      %p31 = scmp.ge.s32.totalorder %s30, 1
      %s32 = scalar_select %p31, 0, %s30
      %s33 = sadd.s32 1, %s24
      %s34 = scalar_select %p31, %s33, %s24
      %p35 = scmp.ge.s32.totalorder %s34, 4
      %s36 = scalar_select %p35, 0, %s34
      %s37 = ssub.s32 %s24, %s36
      %s38 = ssub.s32 %s25, %s32
      %s39 = sor.u32 %s37, %s38
      %p40 = scmp.eq.s32.totalorder %s39, 0
      %s42 = sadd.s32 %s41, 1
      %s43 = scalar_select %p40, %s41, %s42
      %p46 = pneg %p40
      %p47 = scmp.eq.s32.totalorder %s17, 3
      %p48 = por %p46, %p47
      %p49 = scmp.ne.s32.totalorder %s41, %s44
      %p50 = scmp.eq.s32.totalorder %s17, 0
      %p51 = por %p49, %p50
      %p52 = scmp.ne.s32.totalorder %s41, %s44
      %p53 = scmp.eq.s32.totalorder %s22, 3
      %p54 = por %p52, %p53
      %p55 = scmp.ne.s32.totalorder %s44, %s45
      %p56 = scmp.eq.s32.totalorder %s22, 0
      %p57 = por %p55, %p56
      %p58 = scmp.ne.s32.totalorder %s44, %s45
      %p59 = scmp.eq.s32.totalorder %s23, 3
      %p60 = por %p58, %p59
      %p62 = scmp.ne.s32.totalorder %s45, %s61
      %p63 = scmp.eq.s32.totalorder %s23, 0
      %p64 = por %p62, %p63
      %s65 = ssub.s32 %s25, %s32
      %p66 = scmp.eq.s32.totalorder %s65, 0
      %s68 = sadd.s32 %s67, 1
      %s69 = scalar_select %p66, %s67, %s68
      %p72 = pneg %p66
      %p73 = scmp.eq.s32.totalorder %s17, 3
      %p74 = por %p72, %p73
      %p75 = scmp.ne.s32.totalorder %s67, %s70
      %p76 = scmp.eq.s32.totalorder %s17, 0
      %p77 = por %p75, %p76
      %p78 = scmp.ne.s32.totalorder %s67, %s70
      %p79 = scmp.eq.s32.totalorder %s22, 3
      %p80 = por %p78, %p79
      %p81 = scmp.ne.s32.totalorder %s70, %s71
      %p82 = scmp.eq.s32.totalorder %s22, 0
      %p83 = por %p81, %p82
      %p84 = scmp.ne.s32.totalorder %s70, %s71
      %p85 = scmp.eq.s32.totalorder %s23, 3
      %p86 = por %p84, %p85
      %p88 = scmp.ne.s32.totalorder %s71, %s87
      %p89 = scmp.eq.s32.totalorder %s23, 0
      %p90 = por %p88, %p89
      %s91 = ssub.s32 %s24, %s36
      %p92 = scmp.eq.s32.totalorder %s91, 0
      %s94 = sadd.s32 %s93, 1
      %s95 = scalar_select %p92, %s93, %s94
      %p98 = pneg %p92
      %p99 = scmp.eq.s32.totalorder %s17, 3
      %p100 = por %p98, %p99
      %p101 = scmp.ne.s32.totalorder %s93, %s96
      %p102 = scmp.eq.s32.totalorder %s17, 0
      %p103 = por %p101, %p102
      %p104 = scmp.ne.s32.totalorder %s93, %s96
      %p105 = scmp.eq.s32.totalorder %s22, 3
      %p106 = por %p104, %p105
      %p107 = scmp.ne.s32.totalorder %s96, %s97
      %p108 = scmp.eq.s32.totalorder %s22, 0
      %p109 = por %p107, %p108
      %p110 = scmp.ne.s32.totalorder %s96, %s97
      %p111 = scmp.eq.s32.totalorder %s23, 3
      %p112 = por %p110, %p111
      %p114 = scmp.ne.s32.totalorder %s97, %s113
      %p115 = scmp.eq.s32.totalorder %s23, 0
      %p116 = por %p114, %p115
      %s117 = ssub.s32 %s24, %s36
      %p118 = scmp.eq.s32.totalorder %s117, 0
      %s120 = sadd.s32 %s119, 1
      %s121 = scalar_select %p118, %s119, %s120
      %p124 = pneg %p118
      %p125 = scmp.eq.s32.totalorder %s17, 3
      %p126 = por %p124, %p125
      %p127 = scmp.ne.s32.totalorder %s119, %s122
      %p128 = scmp.eq.s32.totalorder %s17, 0
      %p129 = por %p127, %p128
      %p130 = scmp.ne.s32.totalorder %s119, %s122
      %p131 = scmp.eq.s32.totalorder %s22, 3
      %p132 = por %p130, %p131
      %p133 = scmp.ne.s32.totalorder %s122, %s123
      %p134 = scmp.eq.s32.totalorder %s22, 0
      %p135 = por %p133, %p134
      %p136 = scmp.ne.s32.totalorder %s122, %s123
      %p137 = scmp.eq.s32.totalorder %s23, 3
      %p138 = por %p136, %p137
      %p140 = scmp.ne.s32.totalorder %s123, %s139
      %p141 = scmp.eq.s32.totalorder %s23, 0
      %p142 = por %p140, %p141
      %s143 = ssub.s32 %s24, %s36
      %p144 = scmp.eq.s32.totalorder %s143, 0
      %s146 = sadd.s32 %s145, 1
      %s147 = scalar_select %p144, %s145, %s146
      %p150 = pneg %p144
      %p151 = scmp.eq.s32.totalorder %s17, 3
      %p152 = por %p150, %p151
      %p153 = scmp.ne.s32.totalorder %s145, %s148
      %p154 = scmp.eq.s32.totalorder %s17, 0
      %p155 = por %p153, %p154
      %p156 = scmp.ne.s32.totalorder %s145, %s148
      %p157 = scmp.eq.s32.totalorder %s22, 3
      %p158 = por %p156, %p157
      %p159 = scmp.ne.s32.totalorder %s148, %s149
      %p160 = scmp.eq.s32.totalorder %s22, 0
      %p161 = por %p159, %p160
      %p162 = scmp.ne.s32.totalorder %s148, %s149
      %p163 = scmp.eq.s32.totalorder %s23, 3
      %p164 = por %p162, %p163
      %p166 = scmp.ne.s32.totalorder %s149, %s165
      %p167 = scmp.eq.s32.totalorder %s23, 0
      %p168 = por %p166, %p167
      %p169 = scmp.le.s32.totalorder 1, %s17
      %p170 = scmp.lt.s32.totalorder %s17, 5
      %p171 = pnand %p169, %p170
      %p172 = pneg %p171
      // Predicated region
      $region9: #{tpu_custom_call.1} parent=5 // pred_check
        _
      $region10: #{tpu_custom_call.1} parent=5 // pred_check_branch
        %174 = sbr.rel (%p171) target = $region12
      $region11: #{tpu_custom_call.1} parent=5 // pred_region
        %s175 = ssub.s32 %s17, 1
        // Predicated region
        $region13: #{tpu_custom_call.1} parent=11 // pred_check
          %p176 = pneg %p83
        $region14: #{tpu_custom_call.1} parent=11 // pred_check_branch
          %178 = sbr.rel (%p176) target = $region16
        $region15: #{tpu_custom_call.1} parent=11 // pred_region
          %s179 = smul.u32 5, %s27
          %p180 = scmp.lt.s32.totalorder %s179, 4
          %s181 = scalar_select %p180, %s179, 4
          %s182 = smul.addr %s181, 4
          %s183 = scalar_lea.vmem %s1, %s182
          %s184 = smul.u32 5, %s27
        $region16: #{tpu_custom_call.1} parent=11 // pred_fallthru
          _
      $region12: #{tpu_custom_call.1} parent=5 // pred_fallthru
        _
      %p185 = scmp.lt.s32.totalorder %s17, 4
      // Predicated region
      $region17: #{tpu_custom_call.1} parent=5 // pred_check
        %p186 = pneg %p185
      $region18: #{tpu_custom_call.1} parent=5 // pred_check_branch
        %188 = sbr.rel (%p186) target = $region20
      $region19: #{tpu_custom_call.1} parent=5 // pred_region
        // Predicated region
        $region21: #{tpu_custom_call.1} parent=19 // pred_check
          %p189 = pneg %p51
        $region22: #{tpu_custom_call.1} parent=19 // pred_check_branch
          %191 = sbr.rel (%p189) target = $region24
        $region23: #{tpu_custom_call.1} parent=19 // pred_region
          %s192 = smul.u32 16, %s24
          %p193 = scmp.lt.s32.totalorder %s192, 63
          %s194 = scalar_select %p193, %s192, 63
          %p195 = scmp.lt.s32.totalorder %s25, 0
          %s196 = scalar_select %p195, %s25, 0
          %s197 = sadd.s32 %s196, %s194
          %s198 = smul.addr %s197, 4
          %s199 = scalar_lea.vmem %s0, %s198
          %s200 = smul.u32 16, %s24
        $region24: #{tpu_custom_call.1} parent=19 // pred_fallthru
          _
      $region20: #{tpu_custom_call.1} parent=5 // pred_fallthru
        _
      %p201 = scmp.le.s32.totalorder 1, %s17
      %p202 = scmp.lt.s32.totalorder %s17, 5
      %p203 = pnand %p201, %p202
      %p204 = pneg %p203
      // Predicated region
      $region25: #{tpu_custom_call.1} parent=5 // pred_check
        _
      $region26: #{tpu_custom_call.1} parent=5 // pred_check_branch
        %206 = sbr.rel (%p203) target = $region28
      $region27: #{tpu_custom_call.1} parent=5 // pred_region
        %s207 = ssub.s32 %s17, 1
        %s208 = smul.u32 16, %s26
        %p209 = scmp.lt.s32.totalorder %s208, 63
        %s210 = scalar_select %p209, %s208, 63
        %p211 = scmp.lt.s32.totalorder %s27, 0
        %s212 = scalar_select %p211, %s27, 0
        %s213 = sadd.s32 %s212, %s210
        %s214 = smul.addr %s213, 4
        %s215 = scalar_lea.vmem %s0, %s214
        %p216 = pneg %p57
        %p217 = pneg %p54
        %s218 = smul.u32 5, %s27
        %p219 = scmp.lt.s32.totalorder %s218, 4
        %s220 = scalar_select %p219, %s218, 4
        %s221 = smul.addr %s220, 4
        %s222 = scalar_lea.vmem %s1, %s221
        %p223 = pneg %p83
        %p224 = pneg %p80
        %p225 = pneg %p109
        %p226 = pneg %p106
        %s227 = smul.u32 16, %s26
        %p228 = scmp.lt.s32.totalorder %s227, 63
        %s229 = scalar_select %p228, %s227, 63
        %s230 = smul.addr %s229, 4
        %s231 = scalar_lea.vmem %s2, %s230
        %p232 = pneg %p135
        %p233 = pneg %p132
        %s234 = sand.u32 %s122, 1
        %s235 = scalar_lea.sflag [#allocation4], %s234
        %s236 = sand.u32 %s122, 1
        %s237 = scalar_lea.vmem [#allocation3], %s236
        %p238 = pneg %p161
        %p239 = pneg %p158
        %s240 = sand.u32 %s148, 1
        %s241 = scalar_lea.sflag [#allocation6], %s240
        %s242 = sand.u32 %s148, 1
        %s243 = scalar_lea.vmem [#allocation5], %s242
        %s244 = smul.u32 16, %s26
        %p245 = scmp.lt.s32.totalorder %s244, 63
        %s246 = scalar_select %p245, %s244, 63
        %p247 = scmp.lt.s32.totalorder %s27, 0
        %s248 = scalar_select %p247, %s27, 0
        %s249 = sadd.s32 %s248, %s246
        %s250 = smul.addr %s249, 4
        %s251 = scalar_lea.vmem %s0, %s250
        %s252 = smul.u32 16, %s26
        %s253 = smul.u32 5, %s27
        %p254 = scmp.lt.s32.totalorder %s253, 4
        %s255 = scalar_select %p254, %s253, 4
        %s256 = smul.addr %s255, 4
        %s257 = scalar_lea.vmem %s1, %s256
        %s258 = smul.u32 5, %s27
        %s259 = smul.u32 16, %s26
        %p260 = scmp.lt.s32.totalorder %s259, 63
        %s261 = scalar_select %p260, %s259, 63
        %s262 = smul.addr %s261, 4
        %s263 = scalar_lea.vmem %s2, %s262
        %s264 = smul.u32 16, %s26
        %p266 = scmp.eq.s32.totalorder %s27, 0
        // Predicated region
        $region29: #{tpu_custom_call.1} parent=27 // pred_check
          %p267 = pneg %p266
        $region30: #{tpu_custom_call.1} parent=27 // pred_check_branch
          %269 = sbr.rel (%p267) target = $region32
        $region31: #{tpu_custom_call.1} parent=27 // pred_region
          %vm270 = vcmask 64512
          %271 = vst.msk [vmem:[#allocation2] sm:$0xff] %vm270, 0.0
          %272 = vst.msk [vmem:[#allocation2 + $0x8] sm:$0xff] %vm270, 0.0
          %273 = vst.msk [vmem:[#allocation2 + $0x10] sm:$0xff] %vm270, 0.0
          %274 = vst.msk [vmem:[#allocation2 + $0x18] sm:$0xff] %vm270, 0.0
          %275 = vst.msk [vmem:[#allocation2 + $0x20] sm:$0xff] %vm270, 0.0
          %276 = vst.msk [vmem:[#allocation2 + $0x28] sm:$0xff] %vm270, 0.0
          %277 = vst.msk [vmem:[#allocation2 + $0x30] sm:$0xff] %vm270, 0.0
          %278 = vst.msk [vmem:[#allocation2 + $0x38] sm:$0xff] %vm270, 0.0
          %279 = vst.msk [vmem:[#allocation2 + $0x40] sm:$0xff] %vm270, 0.0
          %280 = vst.msk [vmem:[#allocation2 + $0x48] sm:$0xff] %vm270, 0.0
          %281 = vst.msk [vmem:[#allocation2 + $0x50] sm:$0xff] %vm270, 0.0
          %282 = vst.msk [vmem:[#allocation2 + $0x58] sm:$0xff] %vm270, 0.0
          %283 = vst.msk [vmem:[#allocation2 + $0x60] sm:$0xff] %vm270, 0.0
          %284 = vst.msk [vmem:[#allocation2 + $0x68] sm:$0xff] %vm270, 0.0
          %285 = vst.msk [vmem:[#allocation2 + $0x70] sm:$0xff] %vm270, 0.0
          %286 = vst.msk [vmem:[#allocation2 + $0x78] sm:$0xff] %vm270, 0.0
        $region32: #{tpu_custom_call.1} parent=27 // pred_fallthru
          _
        %v287 = vld [vmem:[#allocation2] sm:$0xff]
        %v288 = vld [vmem:[#allocation2 + $0x8] sm:$0xff]
        %v289 = vld [vmem:[#allocation2 + $0x10] sm:$0xff]
        %v290 = vld [vmem:[#allocation2 + $0x18] sm:$0xff]
        %v291 = vld [vmem:[#allocation2 + $0x20] sm:$0xff]
        %v292 = vld [vmem:[#allocation2 + $0x28] sm:$0xff]
        %v293 = vld [vmem:[#allocation2 + $0x30] sm:$0xff]
        %v294 = vld [vmem:[#allocation2 + $0x38] sm:$0xff]
        %v295 = vld [vmem:[#allocation2 + $0x40] sm:$0xff]
        %v296 = vld [vmem:[#allocation2 + $0x48] sm:$0xff]
        %v297 = vld [vmem:[#allocation2 + $0x50] sm:$0xff]
        %v298 = vld [vmem:[#allocation2 + $0x58] sm:$0xff]
        %v299 = vld [vmem:[#allocation2 + $0x60] sm:$0xff]
        %v300 = vld [vmem:[#allocation2 + $0x68] sm:$0xff]
        %v301 = vld [vmem:[#allocation2 + $0x70] sm:$0xff]
        %v302 = vld [vmem:[#allocation2 + $0x78] sm:$0xff]
        %v303 = vld [vmem:[%s251] sm:$0xf]
        %v304 = vld [vmem:[%s251 + $0x4] sm:$0xf]
        %v305 = vld [vmem:[%s251 + $0x8] sm:$0xf]
        %v306 = vld [vmem:[%s251 + $0xc] sm:$0xf]
        %v307 = vld [vmem:[%s251 + $0x10] sm:$0xf]
        %v308 = vld [vmem:[%s251 + $0x14] sm:$0xf]
        %v309 = vld [vmem:[%s251 + $0x18] sm:$0xf]
        %v310 = vld [vmem:[%s251 + $0x1c] sm:$0xf]
        %v311 = vld [vmem:[%s251 + $0x20] sm:$0xf]
        %v312 = vld [vmem:[%s251 + $0x24] sm:$0xf]
        %v313 = vld [vmem:[%s251 + $0x28] sm:$0xf]
        %v314 = vld [vmem:[%s251 + $0x2c] sm:$0xf]
        %v315 = vld [vmem:[%s251 + $0x30] sm:$0xf]
        %v316 = vld [vmem:[%s251 + $0x34] sm:$0xf]
        %v317 = vld [vmem:[%s251 + $0x38] sm:$0xf]
        %v318 = vld [vmem:[%s251 + $0x3c] sm:$0xf]
        %v319 = vld [vmem:[%s257] sm:$0xf]
        %v320 = vld [vmem:[%s257 + $0x4] sm:$0xf]
        %v321 = vld [vmem:[%s257 + $0x8] sm:$0xf]
        %v322 = vld [vmem:[%s257 + $0xc] sm:$0xf]
        %v323 = vld [vmem:[%s257 + $0x10] sm:$0x3]
        %v340 = vunpack.c.l.b16 %v303
        %v341 = vunpack.c.l.b16 %v304
        %v342 = vunpack.c.l.b16 %v305
        %v343 = vunpack.c.l.b16 %v306
        %v344 = vunpack.c.l.b16 %v307
        %v345 = vunpack.c.l.b16 %v308
        %v346 = vunpack.c.l.b16 %v309
        %v347 = vunpack.c.l.b16 %v310
        %v348 = vunpack.c.l.b16 %v311
        %v349 = vunpack.c.l.b16 %v312
        %v350 = vunpack.c.l.b16 %v313
        %v351 = vunpack.c.l.b16 %v314
        %v352 = vunpack.c.l.b16 %v315
        %v353 = vunpack.c.l.b16 %v316
        %v354 = vunpack.c.l.b16 %v317
        %v355 = vunpack.c.l.b16 %v318
        %v356 = vpack.c.b16 %v341, %v340
        %v357 = vpack.c.b16 %v343, %v342
        %v358 = vpack.c.b16 %v345, %v344
        %v359 = vpack.c.b16 %v347, %v346
        %v360 = vpack.c.b16 %v349, %v348
        %v361 = vpack.c.b16 %v351, %v350
        %v362 = vpack.c.b16 %v353, %v352
        %v363 = vpack.c.b16 %v355, %v354
        %v369 = vunpack.c.l.b16 %v319
        %v370 = vunpack.c.l.b16 %v320
        %v371 = vunpack.c.l.b16 %v321
        %v372 = vunpack.c.l.b16 %v322
        %v373 = vunpack.c.l.b16 %v323
        %v374 = vpack.c.b16 %v370, %v369
        %v375 = vpack.c.b16 %v372, %v371
        %v376 = vpack.c.b16 %v373, %v373
        %vm379 = vcmask 293888
        %v381 = vsel %vm379, %v356, 0
        %v384 = vsel %vm379, %v357, 0
        %v387 = vsel %vm379, %v358, 0
        %v390 = vsel %vm379, %v359, 0
        %v393 = vsel %vm379, %v360, 0
        %v396 = vsel %vm379, %v361, 0
        %v399 = vsel %vm379, %v362, 0
        %v402 = vsel %vm379, %v363, 0
        %vm404 = vcmask 1041408
        %v406 = vsel %vm404, %v376, 0
        %408 = vmatprep.subr.bf16.mxu0 0
        %409 = vmatpush1.bf16.msra.mxu0 %v374
        %410 = vmatprep.subr.bf16.mxu0 0
        %411 = vmatpush1.bf16.msra.mxu0 %v375
        %412 = vmatprep.subr.bf16.mxu0 0
        %413 = vmatpush1.bf16.msra.mxu0 %v406
        %414 = vmatprep.subr.bf16.mxu0 0
        %415 = vmatpush1.bf16.msra.mxu0 0
        %416 = vmatprep.subr.bf16.mxu0 0
        %417 = vmatpush1.bf16.msra.mxu0 0
        %418 = vmatprep.subr.bf16.mxu0 0
        %419 = vmatpush1.bf16.msra.mxu0 0
        %420 = vmatprep.subr.bf16.mxu0 0
        %421 = vmatpush1.bf16.msra.mxu0 0
        %422 = vmatprep.subr.bf16.mxu0 0
        %423 = vmatpush1.bf16.msra.mxu0 0
        %424 = vmatprep.subr.bf16.mxu0 0
        %425 = vmatpush1.bf16.msra.mxu0 0
        %426 = vmatprep.subr.bf16.mxu0 0
        %427 = vmatpush1.bf16.msra.mxu0 0
        %428 = vmatprep.subr.bf16.mxu0 0
        %429 = vmatpush1.bf16.msra.mxu0 0
        %430 = vmatprep.subr.bf16.mxu0 0
        %431 = vmatpush1.bf16.msra.mxu0 0
        %432 = vmatprep.subr.bf16.mxu0 0
        %433 = vmatpush1.bf16.msra.mxu0 0
        %434 = vmatprep.subr.bf16.mxu0 0
        %435 = vmatpush1.bf16.msra.mxu0 0
        %436 = vmatprep.subr.bf16.mxu0 0
        %437 = vmatpush1.bf16.msra.mxu0 0
        %438 = vmatprep.subr.bf16.mxu0 0
        %439 = vmatpush1.bf16.msra.mxu0 0
        %440 = vmatprep.mubr.bf16.mxu0 0
        %441 = vmatmul.mubr.bf16.gmra.mrb[0].mxu0 %v381
        %v442 = vpop.f32.mrb[0].mxu0
        %v443 = vadd.f32 0.0, %v442
        %v444 = vpop.f32.mrb[0].mxu0
        %v445 = vpop.f32.mrb[0].mxu0
        %v446 = vadd.f32 0.0, %v445
        %v447 = vpop.f32.mrb[0].mxu0
        %448 = vmatprep.mubr.bf16.mxu0 0
        %449 = vmatmul.mubr.bf16.gmra.mrb[0].mxu0 %v384
        %v450 = vpop.f32.mrb[0].mxu0
        %v451 = vadd.f32 0.0, %v450
        %v452 = vpop.f32.mrb[0].mxu0
        %v453 = vpop.f32.mrb[0].mxu0
        %v454 = vadd.f32 0.0, %v453
        %v455 = vpop.f32.mrb[0].mxu0
        %456 = vmatprep.mubr.bf16.mxu0 0
        %457 = vmatmul.mubr.bf16.gmra.mrb[0].mxu0 %v387
        %v458 = vpop.f32.mrb[0].mxu0
        %v459 = vadd.f32 0.0, %v458
        %v460 = vpop.f32.mrb[0].mxu0
        %v461 = vpop.f32.mrb[0].mxu0
        %v462 = vadd.f32 0.0, %v461
        %v463 = vpop.f32.mrb[0].mxu0
        %464 = vmatprep.mubr.bf16.mxu0 0
        %465 = vmatmul.mubr.bf16.gmra.mrb[0].mxu0 %v390
        %v466 = vpop.f32.mrb[0].mxu0
        %v467 = vadd.f32 0.0, %v466
        %v468 = vpop.f32.mrb[0].mxu0
        %v469 = vpop.f32.mrb[0].mxu0
        %v470 = vadd.f32 0.0, %v469
        %v471 = vpop.f32.mrb[0].mxu0
        %472 = vmatprep.mubr.bf16.mxu0 0
        %473 = vmatmul.mubr.bf16.gmra.mrb[0].mxu0 %v393
        %v474 = vpop.f32.mrb[0].mxu0
        %v475 = vadd.f32 0.0, %v474
        %v476 = vpop.f32.mrb[0].mxu0
        %v477 = vpop.f32.mrb[0].mxu0
        %v478 = vadd.f32 0.0, %v477
        %v479 = vpop.f32.mrb[0].mxu0
        %480 = vmatprep.mubr.bf16.mxu0 0
        %481 = vmatmul.mubr.bf16.gmra.mrb[0].mxu0 %v396
        %v482 = vpop.f32.mrb[0].mxu0
        %v483 = vadd.f32 0.0, %v482
        %v484 = vpop.f32.mrb[0].mxu0
        %v485 = vpop.f32.mrb[0].mxu0
        %v486 = vadd.f32 0.0, %v485
        %v487 = vpop.f32.mrb[0].mxu0
        %488 = vmatprep.mubr.bf16.mxu0 0
        %489 = vmatmul.mubr.bf16.gmra.mrb[0].mxu0 %v399
        %v490 = vpop.f32.mrb[0].mxu0
        %v491 = vadd.f32 0.0, %v490
        %v492 = vpop.f32.mrb[0].mxu0
        %v493 = vpop.f32.mrb[0].mxu0
        %v494 = vadd.f32 0.0, %v493
        %v495 = vpop.f32.mrb[0].mxu0
        %496 = vmatprep.mubr.bf16.mxu0 0
        %497 = vmatmul.mubr.bf16.gmra.mrb[0].mxu0 %v402
        %v498 = vpop.f32.mrb[0].mxu0
        %v499 = vadd.f32 0.0, %v498
        %v500 = vpop.f32.mrb[0].mxu0
        %v501 = vpop.f32.mrb[0].mxu0
        %v502 = vadd.f32 0.0, %v501
        %v503 = vpop.f32.mrb[0].mxu0
        %504 = vdwg.mxu0
        %v505 = vadd.f32 %v287, %v443
        %v506 = vadd.f32 %v288, %v446
        %v507 = vadd.f32 %v289, %v451
        %v508 = vadd.f32 %v290, %v454
        %v509 = vadd.f32 %v291, %v459
        %v510 = vadd.f32 %v292, %v462
        %v511 = vadd.f32 %v293, %v467
        %v512 = vadd.f32 %v294, %v470
        %v513 = vadd.f32 %v295, %v475
        %v514 = vadd.f32 %v296, %v478
        %v515 = vadd.f32 %v297, %v483
        %v516 = vadd.f32 %v298, %v486
        %v517 = vadd.f32 %v299, %v491
        %v518 = vadd.f32 %v300, %v494
        %v519 = vadd.f32 %v301, %v499
        %v520 = vadd.f32 %v302, %v502
        %vm521 = vcmask 64512
        %522 = vst.msk [vmem:[#allocation2] sm:$0xff] %vm521, %v505
        %523 = vst.msk [vmem:[#allocation2 + $0x8] sm:$0xff] %vm521, %v506
        %524 = vst.msk [vmem:[#allocation2 + $0x10] sm:$0xff] %vm521, %v507
        %525 = vst.msk [vmem:[#allocation2 + $0x18] sm:$0xff] %vm521, %v508
        %526 = vst.msk [vmem:[#allocation2 + $0x20] sm:$0xff] %vm521, %v509
        %527 = vst.msk [vmem:[#allocation2 + $0x28] sm:$0xff] %vm521, %v510
        %528 = vst.msk [vmem:[#allocation2 + $0x30] sm:$0xff] %vm521, %v511
        %529 = vst.msk [vmem:[#allocation2 + $0x38] sm:$0xff] %vm521, %v512
        %530 = vst.msk [vmem:[#allocation2 + $0x40] sm:$0xff] %vm521, %v513
        %531 = vst.msk [vmem:[#allocation2 + $0x48] sm:$0xff] %vm521, %v514
        %532 = vst.msk [vmem:[#allocation2 + $0x50] sm:$0xff] %vm521, %v515
        %533 = vst.msk [vmem:[#allocation2 + $0x58] sm:$0xff] %vm521, %v516
        %534 = vst.msk [vmem:[#allocation2 + $0x60] sm:$0xff] %vm521, %v517
        %535 = vst.msk [vmem:[#allocation2 + $0x68] sm:$0xff] %vm521, %v518
        %536 = vst.msk [vmem:[#allocation2 + $0x70] sm:$0xff] %vm521, %v519
        %537 = vst.msk [vmem:[#allocation2 + $0x78] sm:$0xff] %vm521, %v520
        // Predicated region
        $region33: #{tpu_custom_call.1} parent=27 // pred_check
          %p538 = pneg %p266
        $region34: #{tpu_custom_call.1} parent=27 // pred_check_branch
          %540 = sbr.rel (%p538) target = $region36
        $region35: #{tpu_custom_call.1} parent=27 // pred_region
          %v541 = vld [vmem:[#allocation2] sm:$0xff]
          %v542 = vld [vmem:[#allocation2 + $0x8] sm:$0xff]
          %v543 = vld [vmem:[#allocation2 + $0x10] sm:$0xff]
          %v544 = vld [vmem:[#allocation2 + $0x18] sm:$0xff]
          %v545 = vld [vmem:[#allocation2 + $0x20] sm:$0xff]
          %v546 = vld [vmem:[#allocation2 + $0x28] sm:$0xff]
          %v547 = vld [vmem:[#allocation2 + $0x30] sm:$0xff]
          %v548 = vld [vmem:[#allocation2 + $0x38] sm:$0xff]
          %v549 = vld [vmem:[#allocation2 + $0x40] sm:$0xff]
          %v550 = vld [vmem:[#allocation2 + $0x48] sm:$0xff]
          %v551 = vld [vmem:[#allocation2 + $0x50] sm:$0xff]
          %v552 = vld [vmem:[#allocation2 + $0x58] sm:$0xff]
          %v553 = vld [vmem:[#allocation2 + $0x60] sm:$0xff]
          %v554 = vld [vmem:[#allocation2 + $0x68] sm:$0xff]
          %v555 = vld [vmem:[#allocation2 + $0x70] sm:$0xff]
          %v556 = vld [vmem:[#allocation2 + $0x78] sm:$0xff]
          %v557 = vpack.c.bf16 %v542, %v541
          %v558 = vpack.c.bf16 %v544, %v543
          %v559 = vpack.c.bf16 %v546, %v545
          %v560 = vpack.c.bf16 %v548, %v547
          %v561 = vpack.c.bf16 %v550, %v549
          %v562 = vpack.c.bf16 %v552, %v551
          %v563 = vpack.c.bf16 %v554, %v553
          %v564 = vpack.c.bf16 %v556, %v555
          %v573 = vunpack.c.l.b16 %v557
          %v574 = vunpack.c.h.b16 %v557
          %v575 = vunpack.c.l.b16 %v558
          %v576 = vunpack.c.h.b16 %v558
          %v577 = vunpack.c.l.b16 %v559
          %v578 = vunpack.c.h.b16 %v559
          %v579 = vunpack.c.l.b16 %v560
          %v580 = vunpack.c.h.b16 %v560
          %v581 = vunpack.c.l.b16 %v561
          %v582 = vunpack.c.h.b16 %v561
          %v583 = vunpack.c.l.b16 %v562
          %v584 = vunpack.c.h.b16 %v562
          %v585 = vunpack.c.l.b16 %v563
          %v586 = vunpack.c.h.b16 %v563
          %v587 = vunpack.c.l.b16 %v564
          %v588 = vunpack.c.h.b16 %v564
          %v589 = vpack.c.b16 %v573, %v573
          %v590 = vpack.c.b16 %v574, %v574
          %v591 = vpack.c.b16 %v575, %v575
          %v592 = vpack.c.b16 %v576, %v576
          %v593 = vpack.c.b16 %v577, %v577
          %v594 = vpack.c.b16 %v578, %v578
          %v595 = vpack.c.b16 %v579, %v579
          %v596 = vpack.c.b16 %v580, %v580
          %v597 = vpack.c.b16 %v581, %v581
          %v598 = vpack.c.b16 %v582, %v582
          %v599 = vpack.c.b16 %v583, %v583
          %v600 = vpack.c.b16 %v584, %v584
          %v601 = vpack.c.b16 %v585, %v585
          %v602 = vpack.c.b16 %v586, %v586
          %v603 = vpack.c.b16 %v587, %v587
          %v604 = vpack.c.b16 %v588, %v588
          %vm621 = vcmask 60416
          %622 = vst.msk [vmem:[%s263] sm:$0xf] %vm621, %v589
          %623 = vst.msk [vmem:[%s263 + $0x4] sm:$0xf] %vm621, %v590
          %624 = vst.msk [vmem:[%s263 + $0x8] sm:$0xf] %vm621, %v591
          %625 = vst.msk [vmem:[%s263 + $0xc] sm:$0xf] %vm621, %v592
          %626 = vst.msk [vmem:[%s263 + $0x10] sm:$0xf] %vm621, %v593
          %627 = vst.msk [vmem:[%s263 + $0x14] sm:$0xf] %vm621, %v594
          %628 = vst.msk [vmem:[%s263 + $0x18] sm:$0xf] %vm621, %v595
          %629 = vst.msk [vmem:[%s263 + $0x1c] sm:$0xf] %vm621, %v596
          %630 = vst.msk [vmem:[%s263 + $0x20] sm:$0xf] %vm621, %v597
          %631 = vst.msk [vmem:[%s263 + $0x24] sm:$0xf] %vm621, %v598
          %632 = vst.msk [vmem:[%s263 + $0x28] sm:$0xf] %vm621, %v599
          %633 = vst.msk [vmem:[%s263 + $0x2c] sm:$0xf] %vm621, %v600
          %634 = vst.msk [vmem:[%s263 + $0x30] sm:$0xf] %vm621, %v601
          %635 = vst.msk [vmem:[%s263 + $0x34] sm:$0xf] %vm621, %v602
          %636 = vst.msk [vmem:[%s263 + $0x38] sm:$0xf] %vm621, %v603
          %637 = vst.msk [vmem:[%s263 + $0x3c] sm:$0xf] %vm621, %v604
          %v638 = vsel %vm521, %v541, 0.0
          %v639 = vsel %vm521, %v542, 0.0
          %v640 = vadd.f32 %v638, %v639
          %v641 = vsel %vm521, %v543, 0.0
          %v642 = vadd.f32 %v640, %v641
          %v643 = vsel %vm521, %v544, 0.0
          %v644 = vadd.f32 %v642, %v643
          %v645 = vsel %vm521, %v545, 0.0
          %v646 = vadd.f32 %v644, %v645
          %v647 = vsel %vm521, %v546, 0.0
          %v648 = vadd.f32 %v646, %v647
          %v649 = vsel %vm521, %v547, 0.0
          %v650 = vadd.f32 %v648, %v649
          %v651 = vsel %vm521, %v548, 0.0
          %v652 = vadd.f32 %v650, %v651
          %v653 = vsel %vm521, %v549, 0.0
          %v654 = vadd.f32 %v652, %v653
          %v655 = vsel %vm521, %v550, 0.0
          %v656 = vadd.f32 %v654, %v655
          %v657 = vsel %vm521, %v551, 0.0
          %v658 = vadd.f32 %v656, %v657
          %v659 = vsel %vm521, %v552, 0.0
          %v660 = vadd.f32 %v658, %v659
          %v661 = vsel %vm521, %v553, 0.0
          %v662 = vadd.f32 %v660, %v661
          %v663 = vsel %vm521, %v554, 0.0
          %v664 = vadd.f32 %v662, %v663
          %v665 = vsel %vm521, %v555, 0.0
          %v666 = vadd.f32 %v664, %v665
          %v667 = vsel %vm521, %v556, 0.0
          %v668 = vadd.f32 %v666, %v667
          %v669 = vrot.slane %v668, 4
          %v670 = vadd.f32 %v668, %v669
          %v671 = vrot.slane %v670, 2
          %v672 = vadd.f32 %v670, %v671
          %v673 = vrot.slane %v672, 1
          %v674 = vadd.f32 %v672, %v673
          %vm675 = vcmask 57344
          %676 = vst.msk [vmem:[%s237] sm:$0x1] %vm675, %v674
          %v677 = vmul.f32 %v541, %v541
          %v678 = vmul.f32 %v542, %v542
          %v679 = vmul.f32 %v543, %v543
          %v680 = vmul.f32 %v544, %v544
          %v681 = vmul.f32 %v545, %v545
          %v682 = vmul.f32 %v546, %v546
          %v683 = vmul.f32 %v547, %v547
          %v684 = vmul.f32 %v548, %v548
          %v685 = vmul.f32 %v549, %v549
          %v686 = vmul.f32 %v550, %v550
          %v687 = vmul.f32 %v551, %v551
          %v688 = vmul.f32 %v552, %v552
          %v689 = vmul.f32 %v553, %v553
          %v690 = vmul.f32 %v554, %v554
          %v691 = vmul.f32 %v555, %v555
          %v692 = vmul.f32 %v556, %v556
          %v693 = vsel %vm521, %v677, 0.0
          %v694 = vsel %vm521, %v678, 0.0
          %v695 = vadd.f32 %v693, %v694
          %v696 = vsel %vm521, %v679, 0.0
          %v697 = vadd.f32 %v695, %v696
          %v698 = vsel %vm521, %v680, 0.0
          %v699 = vadd.f32 %v697, %v698
          %v700 = vsel %vm521, %v681, 0.0
          %v701 = vadd.f32 %v699, %v700
          %v702 = vsel %vm521, %v682, 0.0
          %v703 = vadd.f32 %v701, %v702
          %v704 = vsel %vm521, %v683, 0.0
          %v705 = vadd.f32 %v703, %v704
          %v706 = vsel %vm521, %v684, 0.0
          %v707 = vadd.f32 %v705, %v706
          %v708 = vsel %vm521, %v685, 0.0
          %v709 = vadd.f32 %v707, %v708
          %v710 = vsel %vm521, %v686, 0.0
          %v711 = vadd.f32 %v709, %v710
          %v712 = vsel %vm521, %v687, 0.0
          %v713 = vadd.f32 %v711, %v712
          %v714 = vsel %vm521, %v688, 0.0
          %v715 = vadd.f32 %v713, %v714
          %v716 = vsel %vm521, %v689, 0.0
          %v717 = vadd.f32 %v715, %v716
          %v718 = vsel %vm521, %v690, 0.0
          %v719 = vadd.f32 %v717, %v718
          %v720 = vsel %vm521, %v691, 0.0
          %v721 = vadd.f32 %v719, %v720
          %v722 = vsel %vm521, %v692, 0.0
          %v723 = vadd.f32 %v721, %v722
          %v724 = vrot.slane %v723, 4
          %v725 = vadd.f32 %v723, %v724
          %v726 = vrot.slane %v725, 2
          %v727 = vadd.f32 %v725, %v726
          %v728 = vrot.slane %v727, 1
          %v729 = vadd.f32 %v727, %v728
          %730 = vst.msk [vmem:[%s243] sm:$0x1] %vm675, %v729
        $region36: #{tpu_custom_call.1} parent=27 // pred_fallthru
          _
        %s731 = smul.u32 16, %s26
        %p732 = scmp.lt.s32.totalorder %s731, 63
        %s733 = scalar_select %p732, %s731, 63
        %s734 = smul.addr %s733, 4
        %s735 = scalar_lea.vmem %s2, %s734
        %s736 = sand.u32 %s122, 1
        %s737 = scalar_lea.sflag [#allocation4], %s736
        %s738 = sand.u32 %s122, 1
        %s739 = scalar_lea.vmem [#allocation3], %s738
        %s740 = sand.u32 %s148, 1
        %s741 = scalar_lea.sflag [#allocation6], %s740
        %s742 = sand.u32 %s148, 1
        %s743 = scalar_lea.vmem [#allocation5], %s742
        // Predicated region
        $region37: #{tpu_custom_call.1} parent=27 // pred_check
          %p744 = pneg %p106
        $region38: #{tpu_custom_call.1} parent=27 // pred_check_branch
          %746 = sbr.rel (%p744) target = $region40
        $region39: #{tpu_custom_call.1} parent=27 // pred_region
          %s747 = smul.u32 16, %s26
        $region40: #{tpu_custom_call.1} parent=27 // pred_fallthru
          _
        // Predicated region
        $region41: #{tpu_custom_call.1} parent=27 // pred_check
          %p748 = pneg %p132
        $region42: #{tpu_custom_call.1} parent=27 // pred_check_branch
          %750 = sbr.rel (%p748) target = $region44
        $region43: #{tpu_custom_call.1} parent=27 // pred_region
          %s752 = ssub.s32 16, 16
          %753 = vsyncadd %s737, %s752
          %s754 = smul.addr %s26, 16
          %s755 = scalar_lea.hbm %s3, %s754
          %s757 = sshll.u32 %s739, 4
          %s758 = int_to_ptr.vmem [resolvable:$true] %s757
          %760 = dma.vmem_to_hbm [thread:$0]  %s758, 16, %s755, %s737
        $region44: #{tpu_custom_call.1} parent=27 // pred_fallthru
          _
        // Predicated region
        $region45: #{tpu_custom_call.1} parent=27 // pred_check
          %p761 = pneg %p158
        $region46: #{tpu_custom_call.1} parent=27 // pred_check_branch
          %763 = sbr.rel (%p761) target = $region48
        $region47: #{tpu_custom_call.1} parent=27 // pred_region
          %s765 = ssub.s32 16, 16
          %766 = vsyncadd %s741, %s765
          %s767 = smul.addr %s26, 16
          %s768 = scalar_lea.hbm %s4, %s767
          %s770 = sshll.u32 %s743, 4
          %s771 = int_to_ptr.vmem [resolvable:$true] %s770
          %773 = dma.vmem_to_hbm [thread:$0]  %s771, 16, %s768, %s741
        $region48: #{tpu_custom_call.1} parent=27 // pred_fallthru
          _
      $region28: #{tpu_custom_call.1} parent=5 // pred_fallthru
        _
      %p774 = scmp.le.s32.totalorder 2, %s17
      // Predicated region
      $region49: #{tpu_custom_call.1} parent=5 // pred_check
        %p775 = pneg %p774
      $region50: #{tpu_custom_call.1} parent=5 // pred_check_branch
        %777 = sbr.rel (%p775) target = $region52
      $region51: #{tpu_custom_call.1} parent=5 // pred_region
        %s778 = ssub.s32 %s17, 2
        // Predicated region
        $region53: #{tpu_custom_call.1} parent=51 // pred_check
          %p779 = pneg %p112
        $region54: #{tpu_custom_call.1} parent=51 // pred_check_branch
          %781 = sbr.rel (%p779) target = $region56
        $region55: #{tpu_custom_call.1} parent=51 // pred_region
          %s782 = smul.u32 16, %s28
          %p783 = scmp.lt.s32.totalorder %s782, 63
          %s784 = scalar_select %p783, %s782, 63
          %s785 = smul.addr %s784, 4
          %s786 = scalar_lea.vmem %s2, %s785
        $region56: #{tpu_custom_call.1} parent=51 // pred_fallthru
          _
        // Predicated region
        $region57: #{tpu_custom_call.1} parent=51 // pred_check
          %p787 = pneg %p138
        $region58: #{tpu_custom_call.1} parent=51 // pred_check_branch
          %789 = sbr.rel (%p787) target = $region60
        $region59: #{tpu_custom_call.1} parent=51 // pred_region
          %s790 = sand.u32 %s123, 1
          %s791 = scalar_lea.sflag [#allocation4], %s790
          %s792 = sand.u32 %s123, 1
          %s793 = scalar_lea.vmem [#allocation3], %s792
          %794 = dma.done %s791, 16
        $region60: #{tpu_custom_call.1} parent=51 // pred_fallthru
          _
        // Predicated region
        $region61: #{tpu_custom_call.1} parent=51 // pred_check
          %p795 = pneg %p164
        $region62: #{tpu_custom_call.1} parent=51 // pred_check_branch
          %797 = sbr.rel (%p795) target = $region64
        $region63: #{tpu_custom_call.1} parent=51 // pred_region
          %s798 = sand.u32 %s149, 1
          %s799 = scalar_lea.sflag [#allocation6], %s798
          %s800 = sand.u32 %s149, 1
          %s801 = scalar_lea.vmem [#allocation5], %s800
          %802 = dma.done %s799, 16
        $region64: #{tpu_custom_call.1} parent=51 // pred_fallthru
          _
      $region52: #{tpu_custom_call.1} parent=5 // pred_fallthru
        _
    $region6: #{tpu_custom_call.1} parent=1 // loop_footer
      %s21 = sadd.s32 1, %s17
    $region7: #{tpu_custom_call.1} parent=1 // loop_footer_branch
      %16 = sbr.rel target = $region3
    $region8: #{tpu_custom_call.1} parent=1 // loop_exit
      _
    %803 = vsyncpa [#allocation4], 1
    %s804 = scalar_lea.sflag [#allocation4], 1
    %805 = vsyncpa %s804, 1
    %806 = vsyncpa [#allocation6], 1
    %s807 = scalar_lea.sflag [#allocation6], 1
    %808 = vsyncpa %s807, 1

</llo_original>
